<compile_context>
chip_gen: v7x
topology: tpu7x:2x2x1
jax: 0.10.0
libtpu: 0.0.40
codegen_flags: <defaults>
</compile_context>

<pallas_src>
import functools

import jax
import jax.numpy as jnp
import numpy as np
from jax.experimental import pallas as pl
from jax.experimental.pallas import tpu as pltpu


def _pick_row_block(H, W, C, max_rows=512):
    """Largest TH dividing H with (TH*W) % 8 == 0, TH*W <= max_rows, TH <= H/2."""
    best = None
    for t in range(1, H + 1):
        if H % t != 0:
            continue
        if (t * W) % 8 != 0:
            continue
        if t * W > max_rows:
            continue
        if H > 1 and t > H // 2:
            continue
        best = t
    return best if best is not None else H   # fallback: one whole-image block


def _ss2d_kernel(x_self_ref, x_mir_ref, w_in_ref, b_in_ref, w_out_ref,
                 b_out_ref, o_ref, *, TH, W):
    f32 = jnp.float32
    bf16 = jnp.bfloat16

    xs = x_self_ref[...]                 # (TH*W, C) f32: rows of output block
    xm = x_mir_ref[...]                  # (TH*W, C) f32: mirrored row block

    # Within-block H flip of the mirror block (local row r <- TH-1-r):
    # TH static, tile-aligned (W % 8 == 0) value slices + one concatenate.
    xmf = jnp.concatenate(
        [xm[(TH - 1 - r) * W:(TH - r) * W, :] for r in range(TH)], axis=0)

    w_in = w_in_ref[...]                 # (C, 2C) bf16
    b_in = b_in_ref[...]                 # (1, 2C) f32
    w_out = w_out_ref[...]               # (2C, C) bf16
    b_out = b_out_ref[...]               # (1, C)  f32

    # proj_in on both blocks: bf16 MXU operands, f32 accumulation.
    z_s = jnp.dot(xs.astype(bf16), w_in, preferred_element_type=f32) + b_in
    z_m = jnp.dot(xmf.astype(bf16), w_in, preferred_element_type=f32) + b_in

    # out = proj_out((3*z^2 + flip_H(z)^2)/4): combine before the (linear)
    # proj_out so only one output matmul is needed.  Stays in f32.
    s = 0.75 * (z_s * z_s) + 0.25 * (z_m * z_m)            # (TH*W, 2C) f32

    u = jnp.dot(s.astype(bf16), w_out, preferred_element_type=f32) + b_out
    o_ref[...] = u.astype(o_ref.dtype)


def ss2d_pallas(x, w_in, b_in, w_out, b_out):
    """x: (B,H,W,C) f32; w_in: (2C,C); b_in: (2C,); w_out: (C,2C); b_out: (C,)."""
    B, H, W, C = x.shape
    C2 = 2 * C

    TH = _pick_row_block(H, W, C)
    NB = H // TH
    M = TH * W

    # PyTorch Linear stores (out, in); pre-transpose and pre-cast to bf16 once.
    w_in_t = jnp.transpose(w_in).astype(jnp.bfloat16)        # (C, 2C)
    w_out_t = jnp.transpose(w_out).astype(jnp.bfloat16)      # (2C, C)
    b_in_2d = b_in.reshape(1, C2).astype(jnp.float32)
    b_out_2d = b_out.reshape(1, C).astype(jnp.float32)

    # Free, contiguous reshape: pixel rows (B, H*W, C); row block j of size
    # TH*W covers image rows [j*TH, (j+1)*TH).
    x_pix = x.reshape(B, H * W, C)

    kernel = functools.partial(_ss2d_kernel, TH=TH, W=W)

    # VMEM budget from actual tiles: 2 input blocks + 1 output block, each
    # double-buffered, plus weights. Capped well under v7x's 64 MiB.
    blk_bytes = M * C * x.dtype.itemsize
    w_bytes = (C * C2 + C2 * C) * 2 + (C2 + C) * 4
    need = 2 * (2 * blk_bytes) + 2 * blk_bytes + 2 * w_bytes
    vmem_limit = int(min(56 * 2**20, max(4 * need, 16 * 2**20)))

    # Advisory cost: proj_in runs twice per pixel (self + mirror), proj_out once.
    flops = 12 * B * H * W * C * C
    bytes_accessed = int(3 * B * H * W * C * x.dtype.itemsize + 2 * w_bytes)
    cost = pl.CostEstimate(flops=flops, transcendentals=0,
                           bytes_accessed=bytes_accessed)

    out_pix = pl.pallas_call(
        kernel,
        out_shape=jax.ShapeDtypeStruct((B, H * W, C), x.dtype),
        grid_spec=pltpu.PrefetchScalarGridSpec(
            num_scalar_prefetch=0,
            grid=(B, NB),
            in_specs=[
                # row block j of image b
                pl.BlockSpec((None, M, C), lambda b, j: (b, j, 0)),
                # mirrored row block NB-1-j of the same image
                pl.BlockSpec((None, M, C), lambda b, j: (b, NB - 1 - j, 0)),
                pl.BlockSpec((C, C2), lambda b, j: (0, 0)),
                pl.BlockSpec((1, C2), lambda b, j: (0, 0)),
                pl.BlockSpec((C2, C), lambda b, j: (0, 0)),
                pl.BlockSpec((1, C), lambda b, j: (0, 0)),
            ],
            out_specs=pl.BlockSpec((None, M, C), lambda b, j: (b, j, 0)),
        ),
        compiler_params=pltpu.CompilerParams(
            dimension_semantics=("parallel", "parallel"),
            vmem_limit_bytes=vmem_limit,
        ),
        cost_estimate=cost,
    )(x_pix, x_pix, w_in_t, b_in_2d, w_out_t, b_out_2d)

    return out_pix.reshape(B, H, W, C)


def ss2d_ref(x, w_in, b_in, w_out, b_out):
    """Pure-JAX literal translation of the PyTorch forward (f32 reference)."""
    z = x @ w_in.T + b_in                          # (B,H,W,2C)
    x_lr = z
    x_rl = jnp.flip(z, 2)
    x_tb = jnp.transpose(z, (0, 2, 1, 3))
    x_bt = jnp.flip(x_tb, 2)
    x_lr = x_lr * x_lr
    x_rl = x_rl * x_rl
    x_tb = x_tb * x_tb
    x_bt = x_bt * x_bt
    comb = (x_lr
            + jnp.flip(x_rl, 2)
            + jnp.transpose(x_tb, (0, 2, 1, 3))
            + jnp.transpose(x_bt, (0, 2, 1, 3))) / 4.0
    return comb @ w_out.T + b_out


if __name__ == "__main__":
    B, H, W, dim = 2, 16, 16, 32
    key = jax.random.PRNGKey(0)
    kx, k1, k2, k3, k4 = jax.random.split(key, 5)

    x = jax.random.normal(kx, (B, H, W, dim), dtype=jnp.float32)
    # proj_in: Linear(dim, 2*dim) -> weight (2*dim, dim), bias (2*dim,)
    w_in = jax.random.normal(k1, (2 * dim, dim), dtype=jnp.float32) * 0.1
    b_in = jax.random.normal(k2, (2 * dim,), dtype=jnp.float32) * 0.1
    # proj_out: Linear(2*dim, dim) -> weight (dim, 2*dim), bias (dim,)
    w_out = jax.random.normal(k3, (dim, 2 * dim), dtype=jnp.float32) * 0.1
    b_out = jax.random.normal(k4, (dim,), dtype=jnp.float32) * 0.1

    y = ss2d_pallas(x, w_in, b_in, w_out, b_out)
    y = jax.block_until_ready(y)

    y_ref = ss2d_ref(x, w_in, b_in, w_out, b_out)
    # bf16 MXU operands (f32 accumulation) -> looser tolerance vs the f32 ref.
    np.testing.assert_allclose(np.asarray(y), np.asarray(y_ref),
                               rtol=3e-2, atol=3e-2)

    print("KERNEL_OK")
</pallas_src>

<mosaic_0001>
module attributes {stable_mosaic.version = 11 : i64} {
  func.func @_ss2d_kernel(%arg0: i32, %arg1: i32, %arg2: memref<1x128x32xf32, #tpu.memory_space<vmem>>, %arg3: memref<1x128x32xf32, #tpu.memory_space<vmem>>, %arg4: memref<32x64xbf16, #tpu.memory_space<vmem>>, %arg5: memref<1x64xf32, #tpu.memory_space<vmem>>, %arg6: memref<64x32xbf16, #tpu.memory_space<vmem>>, %arg7: memref<1x32xf32, #tpu.memory_space<vmem>>, %arg8: memref<1x128x32xf32, #tpu.memory_space<vmem>>) attributes {dimension_semantics = [#tpu.dimension_semantics<parallel>, #tpu.dimension_semantics<parallel>], iteration_bounds = array<i64: 2, 2>, scalar_prefetch = 0 : i64, scratch_operands = 0 : i64, tpu.core_type = #tpu.core_type<tc>, window_params = [{transform_indices = @transform_0, window_bounds = array<i64: 1, 128, 32>}, {transform_indices = @transform_1, window_bounds = array<i64: 1, 128, 32>}, {pipeline_mode = #tpu.pipeline_mode<synchronous>, transform_indices = @transform_2, window_bounds = array<i64: 32, 64>}, {pipeline_mode = #tpu.pipeline_mode<synchronous>, transform_indices = @transform_3, window_bounds = array<i64: 1, 64>}, {pipeline_mode = #tpu.pipeline_mode<synchronous>, transform_indices = @transform_4, window_bounds = array<i64: 64, 32>}, {pipeline_mode = #tpu.pipeline_mode<synchronous>, transform_indices = @transform_5, window_bounds = array<i64: 1, 32>}, {transform_indices = @transform_6, window_bounds = array<i64: 1, 128, 32>}]} {
    %c0 = arith.constant 0 : index
    %c0_0 = arith.constant 0 : index
    %c0_1 = arith.constant 0 : index
    %0 = vector.load %arg2[%c0, %c0_0, %c0_1] : memref<1x128x32xf32, #tpu.memory_space<vmem>>, vector<1x128x32xf32>
    %1 = vector.shape_cast %0 : vector<1x128x32xf32> to vector<128x32xf32>
    %c0_2 = arith.constant 0 : index
    %c0_3 = arith.constant 0 : index
    %c0_4 = arith.constant 0 : index
    %2 = vector.load %arg3[%c0_2, %c0_3, %c0_4] : memref<1x128x32xf32, #tpu.memory_space<vmem>>, vector<1x128x32xf32>
    %3 = vector.shape_cast %2 : vector<1x128x32xf32> to vector<128x32xf32>
    %4 = vector.extract_strided_slice %3 {offsets = [112, 0], sizes = [16, 32], strides = [1, 1]} : vector<128x32xf32> to vector<16x32xf32>
    %5 = vector.extract_strided_slice %3 {offsets = [96, 0], sizes = [16, 32], strides = [1, 1]} : vector<128x32xf32> to vector<16x32xf32>
    %6 = vector.extract_strided_slice %3 {offsets = [80, 0], sizes = [16, 32], strides = [1, 1]} : vector<128x32xf32> to vector<16x32xf32>
    %7 = vector.extract_strided_slice %3 {offsets = [64, 0], sizes = [16, 32], strides = [1, 1]} : vector<128x32xf32> to vector<16x32xf32>
    %8 = vector.extract_strided_slice %3 {offsets = [48, 0], sizes = [16, 32], strides = [1, 1]} : vector<128x32xf32> to vector<16x32xf32>
    %9 = vector.extract_strided_slice %3 {offsets = [32, 0], sizes = [16, 32], strides = [1, 1]} : vector<128x32xf32> to vector<16x32xf32>
    %10 = vector.extract_strided_slice %3 {offsets = [16, 0], sizes = [16, 32], strides = [1, 1]} : vector<128x32xf32> to vector<16x32xf32>
    %11 = vector.extract_strided_slice %3 {offsets = [0, 0], sizes = [16, 32], strides = [1, 1]} : vector<128x32xf32> to vector<16x32xf32>
    %12 = tpu.concatenate %4, %5, %6, %7, %8, %9, %10, %11 in 0 : vector<16x32xf32>, vector<16x32xf32>, vector<16x32xf32>, vector<16x32xf32>, vector<16x32xf32>, vector<16x32xf32>, vector<16x32xf32>, vector<16x32xf32> -> vector<128x32xf32>
    %c0_5 = arith.constant 0 : index
    %c0_6 = arith.constant 0 : index
    %13 = vector.load %arg4[%c0_5, %c0_6] : memref<32x64xbf16, #tpu.memory_space<vmem>>, vector<32x64xbf16>
    %c0_7 = arith.constant 0 : index
    %c0_8 = arith.constant 0 : index
    %14 = vector.load %arg5[%c0_7, %c0_8] : memref<1x64xf32, #tpu.memory_space<vmem>>, vector<1x64xf32>
    %c0_9 = arith.constant 0 : index
    %c0_10 = arith.constant 0 : index
    %15 = vector.load %arg6[%c0_9, %c0_10] : memref<64x32xbf16, #tpu.memory_space<vmem>>, vector<64x32xbf16>
    %c0_11 = arith.constant 0 : index
    %c0_12 = arith.constant 0 : index
    %16 = vector.load %arg7[%c0_11, %c0_12] : memref<1x32xf32, #tpu.memory_space<vmem>>, vector<1x32xf32>
    %17 = arith.truncf %1 : vector<128x32xf32> to vector<128x32xbf16>
    %cst = arith.constant dense<0.000000e+00> : vector<128x64xf32>
    %18 = tpu.matmul %17, %13, %cst {dimension_numbers = #tpu.dot_dimension_numbers<[1], [0], [0], [1], [0, 0, 1, 1], [], []>} : vector<128x32xbf16>, vector<32x64xbf16>, vector<128x64xf32> -> vector<128x64xf32>
    %19 = vector.broadcast %14 : vector<1x64xf32> to vector<128x64xf32>
    %20 = arith.addf %18, %19 : vector<128x64xf32>
    %21 = arith.truncf %12 : vector<128x32xf32> to vector<128x32xbf16>
    %cst_13 = arith.constant dense<0.000000e+00> : vector<128x64xf32>
    %22 = tpu.matmul %21, %13, %cst_13 {dimension_numbers = #tpu.dot_dimension_numbers<[1], [0], [0], [1], [0, 0, 1, 1], [], []>} : vector<128x32xbf16>, vector<32x64xbf16>, vector<128x64xf32> -> vector<128x64xf32>
    %23 = vector.broadcast %14 : vector<1x64xf32> to vector<128x64xf32>
    %24 = arith.addf %22, %23 : vector<128x64xf32>
    %25 = arith.mulf %20, %20 : vector<128x64xf32>
    %cst_14 = arith.constant 7.500000e-01 : f32
    %26 = vector.broadcast %cst_14 : f32 to vector<128x64xf32>
    %27 = arith.mulf %26, %25 : vector<128x64xf32>
    %28 = arith.mulf %24, %24 : vector<128x64xf32>
    %cst_15 = arith.constant 2.500000e-01 : f32
    %29 = vector.broadcast %cst_15 : f32 to vector<128x64xf32>
    %30 = arith.mulf %29, %28 : vector<128x64xf32>
    %31 = arith.addf %27, %30 : vector<128x64xf32>
    %32 = arith.truncf %31 : vector<128x64xf32> to vector<128x64xbf16>
    %cst_16 = arith.constant dense<0.000000e+00> : vector<128x32xf32>
    %33 = tpu.matmul %32, %15, %cst_16 {dimension_numbers = #tpu.dot_dimension_numbers<[1], [0], [0], [1], [0, 0, 1, 1], [], []>} : vector<128x64xbf16>, vector<64x32xbf16>, vector<128x32xf32> -> vector<128x32xf32>
    %34 = vector.broadcast %16 : vector<1x32xf32> to vector<128x32xf32>
    %35 = arith.addf %33, %34 : vector<128x32xf32>
    %c0_17 = arith.constant 0 : index
    %c0_18 = arith.constant 0 : index
    %c0_19 = arith.constant 0 : index
    %36 = vector.load %arg8[%c0_17, %c0_18, %c0_19] : memref<1x128x32xf32, #tpu.memory_space<vmem>>, vector<1x128x32xf32>
    %37 = vector.shape_cast %36 : vector<1x128x32xf32> to vector<128x32xf32>
    %38 = vector.shape_cast %35 : vector<128x32xf32> to vector<1x128x32xf32>
    tpu.vector_store %arg8[%c0_17, %c0_18, %c0_19], %38 {strides = array<i32>} : memref<1x128x32xf32, #tpu.memory_space<vmem>>, vector<1x128x32xf32>,
    return
  }
  func.func @transform_0(%arg0: i32, %arg1: i32) -> (i32, i32, i32) {
    %c0_i32 = arith.constant 0 : i32
    %c0_i32_0 = arith.constant 0 : i32
    return %arg0, %arg1, %c0_i32 : i32, i32, i32
  }
  func.func @transform_1(%arg0: i32, %arg1: i32) -> (i32, i32, i32) {
    %c1_i32 = arith.constant 1 : i32
    %0 = arith.subi %c1_i32, %arg1 : i32
    %c0_i32 = arith.constant 0 : i32
    %c0_i32_0 = arith.constant 0 : i32
    return %arg0, %0, %c0_i32 : i32, i32, i32
  }
  func.func @transform_2(%arg0: i32, %arg1: i32) -> (i32, i32) {
    %c0_i32 = arith.constant 0 : i32
    %c0_i32_0 = arith.constant 0 : i32
    %c0_i32_1 = arith.constant 0 : i32
    return %c0_i32, %c0_i32_0 : i32, i32
  }
  func.func @transform_3(%arg0: i32, %arg1: i32) -> (i32, i32) {
    %c0_i32 = arith.constant 0 : i32
    %c0_i32_0 = arith.constant 0 : i32
    %c0_i32_1 = arith.constant 0 : i32
    return %c0_i32, %c0_i32_0 : i32, i32
  }
  func.func @transform_4(%arg0: i32, %arg1: i32) -> (i32, i32) {
    %c0_i32 = arith.constant 0 : i32
    %c0_i32_0 = arith.constant 0 : i32
    %c0_i32_1 = arith.constant 0 : i32
    return %c0_i32, %c0_i32_0 : i32, i32
  }
  func.func @transform_5(%arg0: i32, %arg1: i32) -> (i32, i32) {
    %c0_i32 = arith.constant 0 : i32
    %c0_i32_0 = arith.constant 0 : i32
    %c0_i32_1 = arith.constant 0 : i32
    return %c0_i32, %c0_i32_0 : i32, i32
  }
  func.func @transform_6(%arg0: i32, %arg1: i32) -> (i32, i32, i32) {
    %c0_i32 = arith.constant 0 : i32
    %c0_i32_0 = arith.constant 0 : i32
    return %arg0, %arg1, %c0_i32 : i32, i32, i32
  }
}

</mosaic_0001>

<llo_original>
// kernel: tpu_custom_call.1
$region0: #{tpu_custom_call.1}
  #allocation0 [shape = 'u32[]', space=smem, size = 0x4, offset = 0x4, fixed_abs, tag = 'smem constant byte address 0x4 - core index']
  #allocation1 [shape = 'u32[144,128]{1,0:T(1,128)}', space=vmem, size = 0x12000, scoped, tag = 'internal scratch']
  %s0 = inlined_call_operand.vmem [shape: f32[2,256,32], index: 0, kind: input, shape index: {}]
  %s1 = inlined_call_operand.vmem [shape: f32[2,256,32], index: 1, kind: input, shape index: {}]
  %s2 = inlined_call_operand.vmem [shape: bf16[32,64], index: 2, kind: input, shape index: {}]
  %s3 = inlined_call_operand.vmem [shape: f32[1,64], index: 3, kind: input, shape index: {}]
  %s4 = inlined_call_operand.vmem [shape: bf16[64,32], index: 4, kind: input, shape index: {}]
  %s5 = inlined_call_operand.vmem [shape: f32[1,32], index: 5, kind: input, shape index: {}]
  %s6 = inlined_call_operand.vmem [shape: f32[2,256,32], index: 6, kind: output, shape index: {}]
  %s7 = sld [smem:[#allocation0]]
  $region57: #{tpu_custom_call.1} parent=0
    _
  %s9 = ssub.s32 1, %s7
  %s10 = scalar_select 0, %s9, %s7
  loop: start=0, step=1, limit=6
  $region2: #{tpu_custom_call.1} parent=0 // loop_pre_header
    _
  $region3: #{tpu_custom_call.1} parent=0 // loop_header
    %s12 = sphi 0, %s16
    %p13 = scmp.ge.s32.totalorder %s12, 6
    %s19 = sphi 0, %s31
    %s20 = sphi 0, %s27
    %s21 = sphi 0, %s19
    %s22 = sphi 0, %s20
    %s23 = sphi 0, %s21
    %s24 = sphi 0, %s22
    %s36 = sphi 0, %s38
    %s39 = sphi 0, %s36
    %s40 = sphi 0, %s39
    %s56 = sphi 0, %s40
    %s66 = sphi 0, %s68
    %s69 = sphi 0, %s66
    %s70 = sphi 0, %s69
    %s86 = sphi 0, %s70
    %s90 = sphi 0, %s90
    %s92 = sphi 0, %s90
    %s93 = sphi 0, %s92
    %s107 = sphi 0, %s93
    %s111 = sphi 0, %s111
    %s113 = sphi 0, %s111
    %s114 = sphi 0, %s113
    %s128 = sphi 0, %s114
    %s132 = sphi 0, %s132
    %s134 = sphi 0, %s132
    %s135 = sphi 0, %s134
    %s149 = sphi 0, %s135
    %s153 = sphi 0, %s153
    %s155 = sphi 0, %s153
    %s156 = sphi 0, %s155
    %s170 = sphi 0, %s156
    %s178 = sphi 0, %s180
    %s181 = sphi 0, %s178
    %s182 = sphi 0, %s181
    %s198 = sphi 0, %s182
  $region4: #{tpu_custom_call.1} parent=0 // loop_header_branch
    %15 = sbr.rel (%p13) target = $region8
  $region5: #{tpu_custom_call.1} parent=0 // loop_body
    %s17 = ssub.s32 %s12, 1
    %s18 = ssub.s32 %s12, 2
    %s25 = sadd.s32 1, %s20
    %p26 = scmp.ge.s32.totalorder %s25, 2
    %s27 = scalar_select %p26, 0, %s25
    %s28 = sadd.s32 1, %s19
    %s29 = scalar_select %p26, %s28, %s19
    %p30 = scmp.ge.s32.totalorder %s29, 2
    %s31 = scalar_select %p30, 0, %s29
    %s32 = ssub.s32 %s19, %s31
    %s33 = ssub.s32 %s20, %s27
    %s34 = sor.u32 %s32, %s33
    %p35 = scmp.eq.s32.totalorder %s34, 0
    %s37 = sadd.s32 %s36, 1
    %s38 = scalar_select %p35, %s36, %s37
    %p41 = pneg %p35
    %p42 = scmp.eq.s32.totalorder %s12, 3
    %p43 = por %p41, %p42
    %p44 = scmp.ne.s32.totalorder %s36, %s39
    %p45 = scmp.eq.s32.totalorder %s12, 0
    %p46 = por %p44, %p45
    %p47 = scmp.ne.s32.totalorder %s36, %s39
    %p48 = scmp.eq.s32.totalorder %s17, 3
    %p49 = por %p47, %p48
    %p50 = scmp.ne.s32.totalorder %s39, %s40
    %p51 = scmp.eq.s32.totalorder %s17, 0
    %p52 = por %p50, %p51
    %p53 = scmp.ne.s32.totalorder %s39, %s40
    %p54 = scmp.eq.s32.totalorder %s18, 3
    %p55 = por %p53, %p54
    %p57 = scmp.ne.s32.totalorder %s40, %s56
    %p58 = scmp.eq.s32.totalorder %s18, 0
    %p59 = por %p57, %p58
    %s60 = ssub.s32 1, %s20
    %s61 = ssub.s32 1, %s27
    %s62 = ssub.s32 %s19, %s31
    %s63 = ssub.s32 %s60, %s61
    %s64 = sor.u32 %s62, %s63
    %p65 = scmp.eq.s32.totalorder %s64, 0
    %s67 = sadd.s32 %s66, 1
    %s68 = scalar_select %p65, %s66, %s67
    %p71 = pneg %p65
    %p72 = scmp.eq.s32.totalorder %s12, 3
    %p73 = por %p71, %p72
    %p74 = scmp.ne.s32.totalorder %s66, %s69
    %p75 = scmp.eq.s32.totalorder %s12, 0
    %p76 = por %p74, %p75
    %p77 = scmp.ne.s32.totalorder %s66, %s69
    %p78 = scmp.eq.s32.totalorder %s17, 3
    %p79 = por %p77, %p78
    %p80 = scmp.ne.s32.totalorder %s69, %s70
    %p81 = scmp.eq.s32.totalorder %s17, 0
    %p82 = por %p80, %p81
    %p83 = scmp.ne.s32.totalorder %s69, %s70
    %p84 = scmp.eq.s32.totalorder %s18, 3
    %p85 = por %p83, %p84
    %p87 = scmp.ne.s32.totalorder %s70, %s86
    %p88 = scmp.eq.s32.totalorder %s18, 0
    %p89 = por %p87, %p88
    %s91 = sadd.s32 %s90, 1
    %p94 = scmp.eq.s32.totalorder %s12, 3
    %p95 = scmp.ne.s32.totalorder %s90, %s92
    %p96 = scmp.eq.s32.totalorder %s12, 0
    %p97 = por %p95, %p96
    %p98 = scmp.ne.s32.totalorder %s90, %s92
    %p99 = scmp.eq.s32.totalorder %s17, 3
    %p100 = por %p98, %p99
    %p101 = scmp.ne.s32.totalorder %s92, %s93
    %p102 = scmp.eq.s32.totalorder %s17, 0
    %p103 = por %p101, %p102
    %p104 = scmp.ne.s32.totalorder %s92, %s93
    %p105 = scmp.eq.s32.totalorder %s18, 3
    %p106 = por %p104, %p105
    %p108 = scmp.ne.s32.totalorder %s93, %s107
    %p109 = scmp.eq.s32.totalorder %s18, 0
    %p110 = por %p108, %p109
    %s112 = sadd.s32 %s111, 1
    %p115 = scmp.eq.s32.totalorder %s12, 3
    %p116 = scmp.ne.s32.totalorder %s111, %s113
    %p117 = scmp.eq.s32.totalorder %s12, 0
    %p118 = por %p116, %p117
    %p119 = scmp.ne.s32.totalorder %s111, %s113
    %p120 = scmp.eq.s32.totalorder %s17, 3
    %p121 = por %p119, %p120
    %p122 = scmp.ne.s32.totalorder %s113, %s114
    %p123 = scmp.eq.s32.totalorder %s17, 0
    %p124 = por %p122, %p123
    %p125 = scmp.ne.s32.totalorder %s113, %s114
    %p126 = scmp.eq.s32.totalorder %s18, 3
    %p127 = por %p125, %p126
    %p129 = scmp.ne.s32.totalorder %s114, %s128
    %p130 = scmp.eq.s32.totalorder %s18, 0
    %p131 = por %p129, %p130
    %s133 = sadd.s32 %s132, 1
    %p136 = scmp.eq.s32.totalorder %s12, 3
    %p137 = scmp.ne.s32.totalorder %s132, %s134
    %p138 = scmp.eq.s32.totalorder %s12, 0
    %p139 = por %p137, %p138
    %p140 = scmp.ne.s32.totalorder %s132, %s134
    %p141 = scmp.eq.s32.totalorder %s17, 3
    %p142 = por %p140, %p141
    %p143 = scmp.ne.s32.totalorder %s134, %s135
    %p144 = scmp.eq.s32.totalorder %s17, 0
    %p145 = por %p143, %p144
    %p146 = scmp.ne.s32.totalorder %s134, %s135
    %p147 = scmp.eq.s32.totalorder %s18, 3
    %p148 = por %p146, %p147
    %p150 = scmp.ne.s32.totalorder %s135, %s149
    %p151 = scmp.eq.s32.totalorder %s18, 0
    %p152 = por %p150, %p151
    %s154 = sadd.s32 %s153, 1
    %p157 = scmp.eq.s32.totalorder %s12, 3
    %p158 = scmp.ne.s32.totalorder %s153, %s155
    %p159 = scmp.eq.s32.totalorder %s12, 0
    %p160 = por %p158, %p159
    %p161 = scmp.ne.s32.totalorder %s153, %s155
    %p162 = scmp.eq.s32.totalorder %s17, 3
    %p163 = por %p161, %p162
    %p164 = scmp.ne.s32.totalorder %s155, %s156
    %p165 = scmp.eq.s32.totalorder %s17, 0
    %p166 = por %p164, %p165
    %p167 = scmp.ne.s32.totalorder %s155, %s156
    %p168 = scmp.eq.s32.totalorder %s18, 3
    %p169 = por %p167, %p168
    %p171 = scmp.ne.s32.totalorder %s156, %s170
    %p172 = scmp.eq.s32.totalorder %s18, 0
    %p173 = por %p171, %p172
    %s174 = ssub.s32 %s19, %s31
    %s175 = ssub.s32 %s20, %s27
    %s176 = sor.u32 %s174, %s175
    %p177 = scmp.eq.s32.totalorder %s176, 0
    %s179 = sadd.s32 %s178, 1
    %s180 = scalar_select %p177, %s178, %s179
    %p183 = pneg %p177
    %p184 = scmp.eq.s32.totalorder %s12, 3
    %p185 = por %p183, %p184
    %p186 = scmp.ne.s32.totalorder %s178, %s181
    %p187 = scmp.eq.s32.totalorder %s12, 0
    %p188 = por %p186, %p187
    %p189 = scmp.ne.s32.totalorder %s178, %s181
    %p190 = scmp.eq.s32.totalorder %s17, 3
    %p191 = por %p189, %p190
    %p192 = scmp.ne.s32.totalorder %s181, %s182
    %p193 = scmp.eq.s32.totalorder %s17, 0
    %p194 = por %p192, %p193
    %p195 = scmp.ne.s32.totalorder %s181, %s182
    %p196 = scmp.eq.s32.totalorder %s18, 3
    %p197 = por %p195, %p196
    %p199 = scmp.ne.s32.totalorder %s182, %s198
    %p200 = scmp.eq.s32.totalorder %s18, 0
    %p201 = por %p199, %p200
    %p202 = scmp.le.s32.totalorder 1, %s12
    %p203 = scmp.lt.s32.totalorder %s12, 5
    %p204 = pnand %p202, %p203
    %p205 = pneg %p204
    // Predicated region
    $region9: #{tpu_custom_call.1} parent=5 // pred_check
      _
    $region10: #{tpu_custom_call.1} parent=5 // pred_check_branch
      %207 = sbr.rel (%p204) target = $region12
    $region11: #{tpu_custom_call.1} parent=5 // pred_region
      %s208 = ssub.s32 %s12, 1
      // Predicated region
      $region13: #{tpu_custom_call.1} parent=11 // pred_check
        %p209 = pneg %p103
      $region14: #{tpu_custom_call.1} parent=11 // pred_check_branch
        %211 = sbr.rel (%p209) target = $region16
      $region15: #{tpu_custom_call.1} parent=11 // pred_region
        _
      $region16: #{tpu_custom_call.1} parent=11 // pred_fallthru
        _
      // Predicated region
      $region17: #{tpu_custom_call.1} parent=11 // pred_check
        %p212 = pneg %p124
      $region18: #{tpu_custom_call.1} parent=11 // pred_check_branch
        %214 = sbr.rel (%p212) target = $region20
      $region19: #{tpu_custom_call.1} parent=11 // pred_region
        _
      $region20: #{tpu_custom_call.1} parent=11 // pred_fallthru
        _
      // Predicated region
      $region21: #{tpu_custom_call.1} parent=11 // pred_check
        %p215 = pneg %p145
      $region22: #{tpu_custom_call.1} parent=11 // pred_check_branch
        %217 = sbr.rel (%p215) target = $region24
      $region23: #{tpu_custom_call.1} parent=11 // pred_region
        _
      $region24: #{tpu_custom_call.1} parent=11 // pred_fallthru
        _
      // Predicated region
      $region25: #{tpu_custom_call.1} parent=11 // pred_check
        %p218 = pneg %p166
      $region26: #{tpu_custom_call.1} parent=11 // pred_check_branch
        %220 = sbr.rel (%p218) target = $region28
      $region27: #{tpu_custom_call.1} parent=11 // pred_region
        _
      $region28: #{tpu_custom_call.1} parent=11 // pred_fallthru
        _
    $region12: #{tpu_custom_call.1} parent=5 // pred_fallthru
      _
    %p221 = scmp.lt.s32.totalorder %s12, 4
    // Predicated region
    $region29: #{tpu_custom_call.1} parent=5 // pred_check
      %p222 = pneg %p221
    $region30: #{tpu_custom_call.1} parent=5 // pred_check_branch
      %224 = sbr.rel (%p222) target = $region32
    $region31: #{tpu_custom_call.1} parent=5 // pred_region
      // Predicated region
      $region33: #{tpu_custom_call.1} parent=31 // pred_check
        %p225 = pneg %p46
      $region34: #{tpu_custom_call.1} parent=31 // pred_check_branch
        %227 = sbr.rel (%p225) target = $region36
      $region35: #{tpu_custom_call.1} parent=31 // pred_region
        %s228 = smul.u32 16, %s20
        %p229 = scmp.lt.s32.totalorder %s19, 1
        %s230 = scalar_select %p229, %s19, 1
        %p231 = scmp.lt.s32.totalorder %s228, 31
        %s232 = scalar_select %p231, %s228, 31
        %s233 = smul.addr %s230, 32
        %s234 = sadd.s32 %s232, %s233
        %s235 = smul.addr %s234, 8
        %s236 = scalar_lea.vmem %s0, %s235
        %s237 = smul.u32 16, %s20
      $region36: #{tpu_custom_call.1} parent=31 // pred_fallthru
        _
      // Predicated region
      $region37: #{tpu_custom_call.1} parent=31 // pred_check
        %p238 = pneg %p76
      $region38: #{tpu_custom_call.1} parent=31 // pred_check_branch
        %240 = sbr.rel (%p238) target = $region40
      $region39: #{tpu_custom_call.1} parent=31 // pred_region
        %s241 = ssub.s32 1, %s20
        %s242 = smul.u32 16, %s241
        %p243 = scmp.lt.s32.totalorder %s19, 1
        %s244 = scalar_select %p243, %s19, 1
        %p245 = scmp.lt.s32.totalorder %s242, 31
        %s246 = scalar_select %p245, %s242, 31
        %s247 = smul.addr %s244, 32
        %s248 = sadd.s32 %s246, %s247
        %s249 = smul.addr %s248, 8
        %s250 = scalar_lea.vmem %s1, %s249
        %s251 = ssub.s32 1, %s20
        %s252 = smul.u32 16, %s251
      $region40: #{tpu_custom_call.1} parent=31 // pred_fallthru
        _
    $region32: #{tpu_custom_call.1} parent=5 // pred_fallthru
      _
    %p253 = scmp.le.s32.totalorder 1, %s12
    %p254 = scmp.lt.s32.totalorder %s12, 5
    %p255 = pnand %p253, %p254
    %p256 = pneg %p255
    // Predicated region
    $region41: #{tpu_custom_call.1} parent=5 // pred_check
      _
    $region42: #{tpu_custom_call.1} parent=5 // pred_check_branch
      %258 = sbr.rel (%p255) target = $region44
    $region43: #{tpu_custom_call.1} parent=5 // pred_region
      %s259 = ssub.s32 %s12, 1
      %s260 = smul.u32 16, %s22
      %p261 = scmp.lt.s32.totalorder %s21, 1
      %s262 = scalar_select %p261, %s21, 1
      %p263 = scmp.lt.s32.totalorder %s260, 31
      %s264 = scalar_select %p263, %s260, 31
      %s265 = smul.addr %s262, 32
      %s266 = sadd.s32 %s264, %s265
      %s267 = smul.addr %s266, 8
      %s268 = scalar_lea.vmem %s0, %s267
      %p269 = pneg %p52
      %p270 = pneg %p49
      %s271 = ssub.s32 1, %s22
      %s272 = smul.u32 16, %s271
      %p273 = scmp.lt.s32.totalorder %s21, 1
      %s274 = scalar_select %p273, %s21, 1
      %p275 = scmp.lt.s32.totalorder %s272, 31
      %s276 = scalar_select %p275, %s272, 31
      %s277 = smul.addr %s274, 32
      %s278 = sadd.s32 %s276, %s277
      %s279 = smul.addr %s278, 8
      %s280 = scalar_lea.vmem %s1, %s279
      %p281 = pneg %p82
      %p282 = pneg %p79
      %p283 = pneg %p103
      %p284 = pneg %p100
      %p285 = pneg %p124
      %p286 = pneg %p121
      %p287 = pneg %p145
      %p288 = pneg %p142
      %p289 = pneg %p166
      %p290 = pneg %p163
      %p291 = pneg %p194
      %p292 = pneg %p191
      %s293 = smul.u32 16, %s22
      %p294 = scmp.lt.s32.totalorder %s21, 1
      %s295 = scalar_select %p294, %s21, 1
      %p296 = scmp.lt.s32.totalorder %s293, 31
      %s297 = scalar_select %p296, %s293, 31
      %s298 = smul.addr %s295, 32
      %s299 = sadd.s32 %s297, %s298
      %s300 = smul.addr %s299, 8
      %s301 = scalar_lea.vmem %s6, %s300
      %s302 = smul.u32 16, %s22
      %p303 = scmp.lt.s32.totalorder %s21, 1
      %s304 = scalar_select %p303, %s21, 1
      %p305 = scmp.lt.s32.totalorder %s302, 31
      %s306 = scalar_select %p305, %s302, 31
      %s307 = smul.addr %s304, 32
      %s308 = sadd.s32 %s306, %s307
      %s309 = smul.addr %s308, 8
      %s310 = scalar_lea.vmem %s0, %s309
      %s311 = smul.u32 16, %s22
      %s312 = ssub.s32 1, %s22
      %s313 = smul.u32 16, %s312
      %p314 = scmp.lt.s32.totalorder %s21, 1
      %s315 = scalar_select %p314, %s21, 1
      %p316 = scmp.lt.s32.totalorder %s313, 31
      %s317 = scalar_select %p316, %s313, 31
      %s318 = smul.addr %s315, 32
      %s319 = sadd.s32 %s317, %s318
      %s320 = smul.addr %s319, 8
      %s321 = scalar_lea.vmem %s1, %s320
      %s322 = ssub.s32 1, %s22
      %s323 = smul.u32 16, %s322
      %s324 = smul.u32 16, %s22
      %p325 = scmp.lt.s32.totalorder %s21, 1
      %s326 = scalar_select %p325, %s21, 1
      %p327 = scmp.lt.s32.totalorder %s324, 31
      %s328 = scalar_select %p327, %s324, 31
      %s329 = smul.addr %s326, 32
      %s330 = sadd.s32 %s328, %s329
      %s331 = smul.addr %s330, 8
      %s332 = scalar_lea.vmem %s6, %s331
      %s333 = smul.u32 16, %s22
      %v335 = vld [vmem:[%s310] sm:$0xff]
      %v336 = vld [vmem:[%s310 + $0x8] sm:$0xff]
      %v337 = vld [vmem:[%s310 + $0x10] sm:$0xff]
      %v338 = vld [vmem:[%s310 + $0x18] sm:$0xff]
      %v339 = vld [vmem:[%s310 + $0x20] sm:$0xff]
      %v340 = vld [vmem:[%s310 + $0x28] sm:$0xff]
      %v341 = vld [vmem:[%s310 + $0x30] sm:$0xff]
      %v342 = vld [vmem:[%s310 + $0x38] sm:$0xff]
      %v343 = vld [vmem:[%s310 + $0x40] sm:$0xff]
      %v344 = vld [vmem:[%s310 + $0x48] sm:$0xff]
      %v345 = vld [vmem:[%s310 + $0x50] sm:$0xff]
      %v346 = vld [vmem:[%s310 + $0x58] sm:$0xff]
      %v347 = vld [vmem:[%s310 + $0x60] sm:$0xff]
      %v348 = vld [vmem:[%s310 + $0x68] sm:$0xff]
      %v349 = vld [vmem:[%s310 + $0x70] sm:$0xff]
      %v350 = vld [vmem:[%s310 + $0x78] sm:$0xff]
      %v351 = vld [vmem:[%s321] sm:$0xff]
      %v352 = vld [vmem:[%s321 + $0x8] sm:$0xff]
      %v353 = vld [vmem:[%s321 + $0x10] sm:$0xff]
      %v354 = vld [vmem:[%s321 + $0x18] sm:$0xff]
      %v355 = vld [vmem:[%s321 + $0x20] sm:$0xff]
      %v356 = vld [vmem:[%s321 + $0x28] sm:$0xff]
      %v357 = vld [vmem:[%s321 + $0x30] sm:$0xff]
      %v358 = vld [vmem:[%s321 + $0x38] sm:$0xff]
      %v359 = vld [vmem:[%s321 + $0x40] sm:$0xff]
      %v360 = vld [vmem:[%s321 + $0x48] sm:$0xff]
      %v361 = vld [vmem:[%s321 + $0x50] sm:$0xff]
      %v362 = vld [vmem:[%s321 + $0x58] sm:$0xff]
      %v363 = vld [vmem:[%s321 + $0x60] sm:$0xff]
      %v364 = vld [vmem:[%s321 + $0x68] sm:$0xff]
      %v365 = vld [vmem:[%s321 + $0x70] sm:$0xff]
      %v366 = vld [vmem:[%s321 + $0x78] sm:$0xff]
      %v367 = vld [vmem:[%s2] sm:$0xf]
      %v368 = vld [vmem:[%s2 + $0x4] sm:$0xf]
      %v369 = vld [vmem:[%s2 + $0x8] sm:$0xf]
      %v370 = vld [vmem:[%s2 + $0xc] sm:$0xf]
      %v371 = vld [vmem:[%s3] sm:$0x1]
      %v372 = vld [vmem:[%s4] sm:$0xf]
      %v373 = vld [vmem:[%s4 + $0x4] sm:$0xf]
      %v374 = vld [vmem:[%s4 + $0x8] sm:$0xf]
      %v375 = vld [vmem:[%s4 + $0xc] sm:$0xf]
      %v376 = vld [vmem:[%s4 + $0x10] sm:$0xf]
      %v377 = vld [vmem:[%s4 + $0x14] sm:$0xf]
      %v378 = vld [vmem:[%s4 + $0x18] sm:$0xf]
      %v379 = vld [vmem:[%s4 + $0x1c] sm:$0xf]
      %v380 = vld [vmem:[%s5] sm:$0x1]
      %v381 = vpack.c.bf16 %v336, %v335
      %v382 = vpack.c.bf16 %v338, %v337
      %v383 = vpack.c.bf16 %v340, %v339
      %v384 = vpack.c.bf16 %v342, %v341
      %v385 = vpack.c.bf16 %v344, %v343
      %v386 = vpack.c.bf16 %v346, %v345
      %v387 = vpack.c.bf16 %v348, %v347
      %v388 = vpack.c.bf16 %v350, %v349
      %v390 = vlaneseq
      %v391 = vshrl.u32 %v390, 7
      %v392 = vsub.s32 0, %v391
      %v393 = vrot.slane %v371, %v392
      %v399 = vunpack.c.l.b16 %v367
      %v400 = vunpack.c.l.b16 %v368
      %v401 = vunpack.c.l.b16 %v369
      %v402 = vunpack.c.l.b16 %v370
      %v403 = vpack.c.b16 %v400, %v399
      %v404 = vpack.c.b16 %v402, %v401
      %vm407 = vcmask 261120
      %v409 = vsel %vm407, %v381, 0
      %v412 = vsel %vm407, %v382, 0
      %v415 = vsel %vm407, %v383, 0
      %v418 = vsel %vm407, %v384, 0
      %v421 = vsel %vm407, %v385, 0
      %v424 = vsel %vm407, %v386, 0
      %v427 = vsel %vm407, %v387, 0
      %v430 = vsel %vm407, %v388, 0
      %432 = vmatprep.subr.bf16.mxu0 0
      %433 = vmatpush1.bf16.msra.mxu0 %v403
      %434 = vmatprep.subr.bf16.mxu0 0
      %435 = vmatpush1.bf16.msra.mxu0 %v404
      %436 = vmatprep.subr.bf16.mxu0 0
      %437 = vmatpush1.bf16.msra.mxu0 0
      %438 = vmatprep.subr.bf16.mxu0 0
      %439 = vmatpush1.bf16.msra.mxu0 0
      %440 = vmatprep.subr.bf16.mxu0 0
      %441 = vmatpush1.bf16.msra.mxu0 0
      %442 = vmatprep.subr.bf16.mxu0 0
      %443 = vmatpush1.bf16.msra.mxu0 0
      %444 = vmatprep.subr.bf16.mxu0 0
      %445 = vmatpush1.bf16.msra.mxu0 0
      %446 = vmatprep.subr.bf16.mxu0 0
      %447 = vmatpush1.bf16.msra.mxu0 0
      %448 = vmatprep.subr.bf16.mxu0 0
      %449 = vmatpush1.bf16.msra.mxu0 0
      %450 = vmatprep.subr.bf16.mxu0 0
      %451 = vmatpush1.bf16.msra.mxu0 0
      %452 = vmatprep.subr.bf16.mxu0 0
      %453 = vmatpush1.bf16.msra.mxu0 0
      %454 = vmatprep.subr.bf16.mxu0 0
      %455 = vmatpush1.bf16.msra.mxu0 0
      %456 = vmatprep.subr.bf16.mxu0 0
      %457 = vmatpush1.bf16.msra.mxu0 0
      %458 = vmatprep.subr.bf16.mxu0 0
      %459 = vmatpush1.bf16.msra.mxu0 0
      %460 = vmatprep.subr.bf16.mxu0 0
      %461 = vmatpush1.bf16.msra.mxu0 0
      %462 = vmatprep.subr.bf16.mxu0 0
      %463 = vmatpush1.bf16.msra.mxu0 0
      %464 = vmatprep.mubr.bf16.mxu0 0
      %465 = vmatmul.mubr.bf16.gmra.mrb[0].mxu0 %v409
      %v466 = vpop.f32.mrb[0].mxu0
      %v467 = vadd.f32 %v393, %v466
      %v468 = vpop.f32.mrb[0].mxu0
      %v469 = vpop.f32.mrb[0].mxu0
      %v470 = vadd.f32 %v393, %v469
      %v471 = vpop.f32.mrb[0].mxu0
      %472 = vmatprep.mubr.bf16.mxu0 0
      %473 = vmatmul.mubr.bf16.gmra.mrb[0].mxu0 %v412
      %v474 = vpop.f32.mrb[0].mxu0
      %v475 = vadd.f32 %v393, %v474
      %v476 = vpop.f32.mrb[0].mxu0
      %v477 = vpop.f32.mrb[0].mxu0
      %v478 = vadd.f32 %v393, %v477
      %v479 = vpop.f32.mrb[0].mxu0
      %480 = vmatprep.mubr.bf16.mxu0 0
      %481 = vmatmul.mubr.bf16.gmra.mrb[0].mxu0 %v415
      %v482 = vpop.f32.mrb[0].mxu0
      %v483 = vadd.f32 %v393, %v482
      %v484 = vpop.f32.mrb[0].mxu0
      %v485 = vpop.f32.mrb[0].mxu0
      %v486 = vadd.f32 %v393, %v485
      %v487 = vpop.f32.mrb[0].mxu0
      %488 = vmatprep.mubr.bf16.mxu0 0
      %489 = vmatmul.mubr.bf16.gmra.mrb[0].mxu0 %v418
      %v490 = vpop.f32.mrb[0].mxu0
      %v491 = vadd.f32 %v393, %v490
      %v492 = vpop.f32.mrb[0].mxu0
      %v493 = vpop.f32.mrb[0].mxu0
      %v494 = vadd.f32 %v393, %v493
      %v495 = vpop.f32.mrb[0].mxu0
      %496 = vmatprep.mubr.bf16.mxu0 0
      %497 = vmatmul.mubr.bf16.gmra.mrb[0].mxu0 %v421
      %v498 = vpop.f32.mrb[0].mxu0
      %v499 = vadd.f32 %v393, %v498
      %v500 = vpop.f32.mrb[0].mxu0
      %v501 = vpop.f32.mrb[0].mxu0
      %v502 = vadd.f32 %v393, %v501
      %v503 = vpop.f32.mrb[0].mxu0
      %504 = vmatprep.mubr.bf16.mxu0 0
      %505 = vmatmul.mubr.bf16.gmra.mrb[0].mxu0 %v424
      %v506 = vpop.f32.mrb[0].mxu0
      %v507 = vadd.f32 %v393, %v506
      %v508 = vpop.f32.mrb[0].mxu0
      %v509 = vpop.f32.mrb[0].mxu0
      %v510 = vadd.f32 %v393, %v509
      %v511 = vpop.f32.mrb[0].mxu0
      %512 = vmatprep.mubr.bf16.mxu0 0
      %513 = vmatmul.mubr.bf16.gmra.mrb[0].mxu0 %v427
      %v514 = vpop.f32.mrb[0].mxu0
      %v515 = vadd.f32 %v393, %v514
      %v516 = vpop.f32.mrb[0].mxu0
      %v517 = vpop.f32.mrb[0].mxu0
      %v518 = vadd.f32 %v393, %v517
      %v519 = vpop.f32.mrb[0].mxu0
      %520 = vmatprep.mubr.bf16.mxu0 0
      %521 = vmatmul.mubr.bf16.gmra.mrb[0].mxu0 %v430
      %v522 = vpop.f32.mrb[0].mxu0
      %v523 = vadd.f32 %v393, %v522
      %v524 = vpop.f32.mrb[0].mxu0
      %v525 = vpop.f32.mrb[0].mxu0
      %v526 = vadd.f32 %v393, %v525
      %v527 = vpop.f32.mrb[0].mxu0
      %528 = vdwg.mxu0
      %v529 = vpack.c.bf16 %v366, %v365
      %v530 = vpack.c.bf16 %v364, %v363
      %v531 = vpack.c.bf16 %v362, %v361
      %v532 = vpack.c.bf16 %v360, %v359
      %v533 = vpack.c.bf16 %v358, %v357
      %v534 = vpack.c.bf16 %v356, %v355
      %v535 = vpack.c.bf16 %v354, %v353
      %v536 = vpack.c.bf16 %v352, %v351
      %v538 = vsel %vm407, %v529, 0
      %v541 = vsel %vm407, %v530, 0
      %v544 = vsel %vm407, %v531, 0
      %v547 = vsel %vm407, %v532, 0
      %v550 = vsel %vm407, %v533, 0
      %v553 = vsel %vm407, %v534, 0
      %v556 = vsel %vm407, %v535, 0
      %v559 = vsel %vm407, %v536, 0
      %561 = vmatprep.subr.bf16.mxu0 0
      %562 = vmatpush1.bf16.msra.mxu0 %v403
      %563 = vmatprep.subr.bf16.mxu0 0
      %564 = vmatpush1.bf16.msra.mxu0 %v404
      %565 = vmatprep.subr.bf16.mxu0 0
      %566 = vmatpush1.bf16.msra.mxu0 0
      %567 = vmatprep.subr.bf16.mxu0 0
      %568 = vmatpush1.bf16.msra.mxu0 0
      %569 = vmatprep.subr.bf16.mxu0 0
      %570 = vmatpush1.bf16.msra.mxu0 0
      %571 = vmatprep.subr.bf16.mxu0 0
      %572 = vmatpush1.bf16.msra.mxu0 0
      %573 = vmatprep.subr.bf16.mxu0 0
      %574 = vmatpush1.bf16.msra.mxu0 0
      %575 = vmatprep.subr.bf16.mxu0 0
      %576 = vmatpush1.bf16.msra.mxu0 0
      %577 = vmatprep.subr.bf16.mxu0 0
      %578 = vmatpush1.bf16.msra.mxu0 0
      %579 = vmatprep.subr.bf16.mxu0 0
      %580 = vmatpush1.bf16.msra.mxu0 0
      %581 = vmatprep.subr.bf16.mxu0 0
      %582 = vmatpush1.bf16.msra.mxu0 0
      %583 = vmatprep.subr.bf16.mxu0 0
      %584 = vmatpush1.bf16.msra.mxu0 0
      %585 = vmatprep.subr.bf16.mxu0 0
      %586 = vmatpush1.bf16.msra.mxu0 0
      %587 = vmatprep.subr.bf16.mxu0 0
      %588 = vmatpush1.bf16.msra.mxu0 0
      %589 = vmatprep.subr.bf16.mxu0 0
      %590 = vmatpush1.bf16.msra.mxu0 0
      %591 = vmatprep.subr.bf16.mxu0 0
      %592 = vmatpush1.bf16.msra.mxu0 0
      %593 = vmatprep.mubr.bf16.mxu0 0
      %594 = vmatmul.mubr.bf16.gmra.mrb[0].mxu0 %v538
      %v595 = vpop.f32.mrb[0].mxu0
      %v596 = vadd.f32 %v393, %v595
      %v597 = vpop.f32.mrb[0].mxu0
      %v598 = vpop.f32.mrb[0].mxu0
      %v599 = vadd.f32 %v393, %v598
      %v600 = vpop.f32.mrb[0].mxu0
      %601 = vmatprep.mubr.bf16.mxu0 0
      %602 = vmatmul.mubr.bf16.gmra.mrb[0].mxu0 %v541
      %v603 = vpop.f32.mrb[0].mxu0
      %v604 = vadd.f32 %v393, %v603
      %v605 = vpop.f32.mrb[0].mxu0
      %v606 = vpop.f32.mrb[0].mxu0
      %v607 = vadd.f32 %v393, %v606
      %v608 = vpop.f32.mrb[0].mxu0
      %609 = vmatprep.mubr.bf16.mxu0 0
      %610 = vmatmul.mubr.bf16.gmra.mrb[0].mxu0 %v544
      %v611 = vpop.f32.mrb[0].mxu0
      %v612 = vadd.f32 %v393, %v611
      %v613 = vpop.f32.mrb[0].mxu0
      %v614 = vpop.f32.mrb[0].mxu0
      %v615 = vadd.f32 %v393, %v614
      %v616 = vpop.f32.mrb[0].mxu0
      %617 = vmatprep.mubr.bf16.mxu0 0
      %618 = vmatmul.mubr.bf16.gmra.mrb[0].mxu0 %v547
      %v619 = vpop.f32.mrb[0].mxu0
      %v620 = vadd.f32 %v393, %v619
      %v621 = vpop.f32.mrb[0].mxu0
      %v622 = vpop.f32.mrb[0].mxu0
      %v623 = vadd.f32 %v393, %v622
      %v624 = vpop.f32.mrb[0].mxu0
      %625 = vmatprep.mubr.bf16.mxu0 0
      %626 = vmatmul.mubr.bf16.gmra.mrb[0].mxu0 %v550
      %v627 = vpop.f32.mrb[0].mxu0
      %v628 = vadd.f32 %v393, %v627
      %v629 = vpop.f32.mrb[0].mxu0
      %v630 = vpop.f32.mrb[0].mxu0
      %v631 = vadd.f32 %v393, %v630
      %v632 = vpop.f32.mrb[0].mxu0
      %633 = vmatprep.mubr.bf16.mxu0 0
      %634 = vmatmul.mubr.bf16.gmra.mrb[0].mxu0 %v553
      %v635 = vpop.f32.mrb[0].mxu0
      %v636 = vadd.f32 %v393, %v635
      %v637 = vpop.f32.mrb[0].mxu0
      %v638 = vpop.f32.mrb[0].mxu0
      %v639 = vadd.f32 %v393, %v638
      %v640 = vpop.f32.mrb[0].mxu0
      %641 = vmatprep.mubr.bf16.mxu0 0
      %642 = vmatmul.mubr.bf16.gmra.mrb[0].mxu0 %v556
      %v643 = vpop.f32.mrb[0].mxu0
      %v644 = vadd.f32 %v393, %v643
      %v645 = vpop.f32.mrb[0].mxu0
      %v646 = vpop.f32.mrb[0].mxu0
      %v647 = vadd.f32 %v393, %v646
      %v648 = vpop.f32.mrb[0].mxu0
      %649 = vmatprep.mubr.bf16.mxu0 0
      %650 = vmatmul.mubr.bf16.gmra.mrb[0].mxu0 %v559
      %v651 = vpop.f32.mrb[0].mxu0
      %v652 = vadd.f32 %v393, %v651
      %v653 = vpop.f32.mrb[0].mxu0
      %v654 = vpop.f32.mrb[0].mxu0
      %v655 = vadd.f32 %v393, %v654
      %v656 = vpop.f32.mrb[0].mxu0
      %657 = vdwg.mxu0
      %v658 = vmul.f32 %v467, %v467
      %v659 = vmul.f32 %v470, %v470
      %v660 = vmul.f32 %v475, %v475
      %v661 = vmul.f32 %v478, %v478
      %v662 = vmul.f32 %v483, %v483
      %v663 = vmul.f32 %v486, %v486
      %v664 = vmul.f32 %v491, %v491
      %v665 = vmul.f32 %v494, %v494
      %v666 = vmul.f32 %v499, %v499
      %v667 = vmul.f32 %v502, %v502
      %v668 = vmul.f32 %v507, %v507
      %v669 = vmul.f32 %v510, %v510
      %v670 = vmul.f32 %v515, %v515
      %v671 = vmul.f32 %v518, %v518
      %v672 = vmul.f32 %v523, %v523
      %v673 = vmul.f32 %v526, %v526
      %v674 = vmul.f32 %v658, 0.75
      %v675 = vmul.f32 %v659, 0.75
      %v676 = vmul.f32 %v660, 0.75
      %v677 = vmul.f32 %v661, 0.75
      %v678 = vmul.f32 %v662, 0.75
      %v679 = vmul.f32 %v663, 0.75
      %v680 = vmul.f32 %v664, 0.75
      %v681 = vmul.f32 %v665, 0.75
      %v682 = vmul.f32 %v666, 0.75
      %v683 = vmul.f32 %v667, 0.75
      %v684 = vmul.f32 %v668, 0.75
      %v685 = vmul.f32 %v669, 0.75
      %v686 = vmul.f32 %v670, 0.75
      %v687 = vmul.f32 %v671, 0.75
      %v688 = vmul.f32 %v672, 0.75
      %v689 = vmul.f32 %v673, 0.75
      %v690 = vmul.f32 %v596, %v596
      %v691 = vmul.f32 %v599, %v599
      %v692 = vmul.f32 %v604, %v604
      %v693 = vmul.f32 %v607, %v607
      %v694 = vmul.f32 %v612, %v612
      %v695 = vmul.f32 %v615, %v615
      %v696 = vmul.f32 %v620, %v620
      %v697 = vmul.f32 %v623, %v623
      %v698 = vmul.f32 %v628, %v628
      %v699 = vmul.f32 %v631, %v631
      %v700 = vmul.f32 %v636, %v636
      %v701 = vmul.f32 %v639, %v639
      %v702 = vmul.f32 %v644, %v644
      %v703 = vmul.f32 %v647, %v647
      %v704 = vmul.f32 %v652, %v652
      %v705 = vmul.f32 %v655, %v655
      %v706 = vmul.f32 %v690, 0.25
      %v707 = vmul.f32 %v691, 0.25
      %v708 = vmul.f32 %v692, 0.25
      %v709 = vmul.f32 %v693, 0.25
      %v710 = vmul.f32 %v694, 0.25
      %v711 = vmul.f32 %v695, 0.25
      %v712 = vmul.f32 %v696, 0.25
      %v713 = vmul.f32 %v697, 0.25
      %v714 = vmul.f32 %v698, 0.25
      %v715 = vmul.f32 %v699, 0.25
      %v716 = vmul.f32 %v700, 0.25
      %v717 = vmul.f32 %v701, 0.25
      %v718 = vmul.f32 %v702, 0.25
      %v719 = vmul.f32 %v703, 0.25
      %v720 = vmul.f32 %v704, 0.25
      %v721 = vmul.f32 %v705, 0.25
      %v722 = vadd.f32 %v674, %v706
      %v723 = vadd.f32 %v675, %v707
      %v724 = vadd.f32 %v676, %v708
      %v725 = vadd.f32 %v677, %v709
      %v726 = vadd.f32 %v678, %v710
      %v727 = vadd.f32 %v679, %v711
      %v728 = vadd.f32 %v680, %v712
      %v729 = vadd.f32 %v681, %v713
      %v730 = vadd.f32 %v682, %v714
      %v731 = vadd.f32 %v683, %v715
      %v732 = vadd.f32 %v684, %v716
      %v733 = vadd.f32 %v685, %v717
      %v734 = vadd.f32 %v686, %v718
      %v735 = vadd.f32 %v687, %v719
      %v736 = vadd.f32 %v688, %v720
      %v737 = vadd.f32 %v689, %v721
      %v738 = vpack.c.bf16 %v723, %v722
      %v739 = vpack.c.bf16 %v725, %v724
      %v740 = vpack.c.bf16 %v727, %v726
      %v741 = vpack.c.bf16 %v729, %v728
      %v742 = vpack.c.bf16 %v731, %v730
      %v743 = vpack.c.bf16 %v733, %v732
      %v744 = vpack.c.bf16 %v735, %v734
      %v745 = vpack.c.bf16 %v737, %v736
      %v747 = vlaneseq
      %v748 = vshrl.u32 %v747, 7
      %v749 = vsub.s32 0, %v748
      %v750 = vrot.slane %v380, %v749
      %v760 = vunpack.c.l.b16 %v372
      %v761 = vunpack.c.l.b16 %v373
      %v762 = vunpack.c.l.b16 %v374
      %v763 = vunpack.c.l.b16 %v375
      %v764 = vunpack.c.l.b16 %v376
      %v765 = vunpack.c.l.b16 %v377
      %v766 = vunpack.c.l.b16 %v378
      %v767 = vunpack.c.l.b16 %v379
      %v768 = vpack.c.b16 %v761, %v760
      %v769 = vpack.c.b16 %v763, %v762
      %v770 = vpack.c.b16 %v765, %v764
      %v771 = vpack.c.b16 %v767, %v766
      %vm776 = vcmask 523264
      %v778 = vsel %vm776, %v738, 0
      %v781 = vsel %vm776, %v739, 0
      %v784 = vsel %vm776, %v740, 0
      %v787 = vsel %vm776, %v741, 0
      %v790 = vsel %vm776, %v742, 0
      %v793 = vsel %vm776, %v743, 0
      %v796 = vsel %vm776, %v744, 0
      %v799 = vsel %vm776, %v745, 0
      %801 = vmatprep.subr.bf16.mxu0 0
      %802 = vmatpush1.bf16.msra.mxu0 %v768
      %803 = vmatprep.subr.bf16.mxu0 0
      %804 = vmatpush1.bf16.msra.mxu0 %v769
      %805 = vmatprep.subr.bf16.mxu0 0
      %806 = vmatpush1.bf16.msra.mxu0 %v770
      %807 = vmatprep.subr.bf16.mxu0 0
      %808 = vmatpush1.bf16.msra.mxu0 %v771
      %809 = vmatprep.subr.bf16.mxu0 0
      %810 = vmatpush1.bf16.msra.mxu0 0
      %811 = vmatprep.subr.bf16.mxu0 0
      %812 = vmatpush1.bf16.msra.mxu0 0
      %813 = vmatprep.subr.bf16.mxu0 0
      %814 = vmatpush1.bf16.msra.mxu0 0
      %815 = vmatprep.subr.bf16.mxu0 0
      %816 = vmatpush1.bf16.msra.mxu0 0
      %817 = vmatprep.subr.bf16.mxu0 0
      %818 = vmatpush1.bf16.msra.mxu0 0
      %819 = vmatprep.subr.bf16.mxu0 0
      %820 = vmatpush1.bf16.msra.mxu0 0
      %821 = vmatprep.subr.bf16.mxu0 0
      %822 = vmatpush1.bf16.msra.mxu0 0
      %823 = vmatprep.subr.bf16.mxu0 0
      %824 = vmatpush1.bf16.msra.mxu0 0
      %825 = vmatprep.subr.bf16.mxu0 0
      %826 = vmatpush1.bf16.msra.mxu0 0
      %827 = vmatprep.subr.bf16.mxu0 0
      %828 = vmatpush1.bf16.msra.mxu0 0
      %829 = vmatprep.subr.bf16.mxu0 0
      %830 = vmatpush1.bf16.msra.mxu0 0
      %831 = vmatprep.subr.bf16.mxu0 0
      %832 = vmatpush1.bf16.msra.mxu0 0
      %833 = vmatprep.mubr.bf16.mxu0 0
      %834 = vmatmul.mubr.bf16.gmra.mrb[0].mxu0 %v778
      %v835 = vpop.f32.mrb[0].mxu0
      %v836 = vadd.f32 %v750, %v835
      %v837 = vpop.f32.mrb[0].mxu0
      %v838 = vpop.f32.mrb[0].mxu0
      %v839 = vadd.f32 %v750, %v838
      %v840 = vpop.f32.mrb[0].mxu0
      %841 = vmatprep.mubr.bf16.mxu0 0
      %842 = vmatmul.mubr.bf16.gmra.mrb[0].mxu0 %v781
      %v843 = vpop.f32.mrb[0].mxu0
      %v844 = vadd.f32 %v750, %v843
      %v845 = vpop.f32.mrb[0].mxu0
      %v846 = vpop.f32.mrb[0].mxu0
      %v847 = vadd.f32 %v750, %v846
      %v848 = vpop.f32.mrb[0].mxu0
      %849 = vmatprep.mubr.bf16.mxu0 0
      %850 = vmatmul.mubr.bf16.gmra.mrb[0].mxu0 %v784
      %v851 = vpop.f32.mrb[0].mxu0
      %v852 = vadd.f32 %v750, %v851
      %v853 = vpop.f32.mrb[0].mxu0
      %v854 = vpop.f32.mrb[0].mxu0
      %v855 = vadd.f32 %v750, %v854
      %v856 = vpop.f32.mrb[0].mxu0
      %857 = vmatprep.mubr.bf16.mxu0 0
      %858 = vmatmul.mubr.bf16.gmra.mrb[0].mxu0 %v787
      %v859 = vpop.f32.mrb[0].mxu0
      %v860 = vadd.f32 %v750, %v859
      %v861 = vpop.f32.mrb[0].mxu0
      %v862 = vpop.f32.mrb[0].mxu0
      %v863 = vadd.f32 %v750, %v862
      %v864 = vpop.f32.mrb[0].mxu0
      %865 = vmatprep.mubr.bf16.mxu0 0
      %866 = vmatmul.mubr.bf16.gmra.mrb[0].mxu0 %v790
      %v867 = vpop.f32.mrb[0].mxu0
      %v868 = vadd.f32 %v750, %v867
      %v869 = vpop.f32.mrb[0].mxu0
      %v870 = vpop.f32.mrb[0].mxu0
      %v871 = vadd.f32 %v750, %v870
      %v872 = vpop.f32.mrb[0].mxu0
      %873 = vmatprep.mubr.bf16.mxu0 0
      %874 = vmatmul.mubr.bf16.gmra.mrb[0].mxu0 %v793
      %v875 = vpop.f32.mrb[0].mxu0
      %v876 = vadd.f32 %v750, %v875
      %v877 = vpop.f32.mrb[0].mxu0
      %v878 = vpop.f32.mrb[0].mxu0
      %v879 = vadd.f32 %v750, %v878
      %v880 = vpop.f32.mrb[0].mxu0
      %881 = vmatprep.mubr.bf16.mxu0 0
      %882 = vmatmul.mubr.bf16.gmra.mrb[0].mxu0 %v796
      %v883 = vpop.f32.mrb[0].mxu0
      %v884 = vadd.f32 %v750, %v883
      %v885 = vpop.f32.mrb[0].mxu0
      %v886 = vpop.f32.mrb[0].mxu0
      %v887 = vadd.f32 %v750, %v886
      %v888 = vpop.f32.mrb[0].mxu0
      %889 = vmatprep.mubr.bf16.mxu0 0
      %890 = vmatmul.mubr.bf16.gmra.mrb[0].mxu0 %v799
      %v891 = vpop.f32.mrb[0].mxu0
      %v892 = vadd.f32 %v750, %v891
      %v893 = vpop.f32.mrb[0].mxu0
      %v894 = vpop.f32.mrb[0].mxu0
      %v895 = vadd.f32 %v750, %v894
      %v896 = vpop.f32.mrb[0].mxu0
      %897 = vdwg.mxu0
      %898 = vst.msk [vmem:[%s332] sm:$0xff] %vm407, %v836
      %899 = vst.msk [vmem:[%s332 + $0x8] sm:$0xff] %vm407, %v839
      %900 = vst.msk [vmem:[%s332 + $0x10] sm:$0xff] %vm407, %v844
      %901 = vst.msk [vmem:[%s332 + $0x18] sm:$0xff] %vm407, %v847
      %902 = vst.msk [vmem:[%s332 + $0x20] sm:$0xff] %vm407, %v852
      %903 = vst.msk [vmem:[%s332 + $0x28] sm:$0xff] %vm407, %v855
      %904 = vst.msk [vmem:[%s332 + $0x30] sm:$0xff] %vm407, %v860
      %905 = vst.msk [vmem:[%s332 + $0x38] sm:$0xff] %vm407, %v863
      %906 = vst.msk [vmem:[%s332 + $0x40] sm:$0xff] %vm407, %v868
      %907 = vst.msk [vmem:[%s332 + $0x48] sm:$0xff] %vm407, %v871
      %908 = vst.msk [vmem:[%s332 + $0x50] sm:$0xff] %vm407, %v876
      %909 = vst.msk [vmem:[%s332 + $0x58] sm:$0xff] %vm407, %v879
      %910 = vst.msk [vmem:[%s332 + $0x60] sm:$0xff] %vm407, %v884
      %911 = vst.msk [vmem:[%s332 + $0x68] sm:$0xff] %vm407, %v887
      %912 = vst.msk [vmem:[%s332 + $0x70] sm:$0xff] %vm407, %v892
      %913 = vst.msk [vmem:[%s332 + $0x78] sm:$0xff] %vm407, %v895
      %s914 = smul.u32 16, %s22
      %p915 = scmp.lt.s32.totalorder %s21, 1
      %s916 = scalar_select %p915, %s21, 1
      %p917 = scmp.lt.s32.totalorder %s914, 31
      %s918 = scalar_select %p917, %s914, 31
      %s919 = smul.addr %s916, 32
      %s920 = sadd.s32 %s918, %s919
      %s921 = smul.addr %s920, 8
      %s922 = scalar_lea.vmem %s6, %s921
      // Predicated region
      $region45: #{tpu_custom_call.1} parent=43 // pred_check
        %p923 = pneg %p191
      $region46: #{tpu_custom_call.1} parent=43 // pred_check_branch
        %925 = sbr.rel (%p923) target = $region48
      $region47: #{tpu_custom_call.1} parent=43 // pred_region
        %s926 = smul.u32 16, %s22
      $region48: #{tpu_custom_call.1} parent=43 // pred_fallthru
        _
    $region44: #{tpu_custom_call.1} parent=5 // pred_fallthru
      _
    %p927 = scmp.le.s32.totalorder 2, %s12
    // Predicated region
    $region49: #{tpu_custom_call.1} parent=5 // pred_check
      %p928 = pneg %p927
    $region50: #{tpu_custom_call.1} parent=5 // pred_check_branch
      %930 = sbr.rel (%p928) target = $region52
    $region51: #{tpu_custom_call.1} parent=5 // pred_region
      %s931 = ssub.s32 %s12, 2
      // Predicated region
      $region53: #{tpu_custom_call.1} parent=51 // pred_check
        %p932 = pneg %p197
      $region54: #{tpu_custom_call.1} parent=51 // pred_check_branch
        %934 = sbr.rel (%p932) target = $region56
      $region55: #{tpu_custom_call.1} parent=51 // pred_region
        %s935 = smul.u32 16, %s24
        %p936 = scmp.lt.s32.totalorder %s23, 1
        %s937 = scalar_select %p936, %s23, 1
        %p938 = scmp.lt.s32.totalorder %s935, 31
        %s939 = scalar_select %p938, %s935, 31
        %s940 = smul.addr %s937, 32
        %s941 = sadd.s32 %s939, %s940
        %s942 = smul.addr %s941, 8
        %s943 = scalar_lea.vmem %s6, %s942
      $region56: #{tpu_custom_call.1} parent=51 // pred_fallthru
        _
    $region52: #{tpu_custom_call.1} parent=5 // pred_fallthru
      _
  $region6: #{tpu_custom_call.1} parent=0 // loop_footer
    %s16 = sadd.s32 1, %s12
  $region7: #{tpu_custom_call.1} parent=0 // loop_footer_branch
    %11 = sbr.rel target = $region3
  $region8: #{tpu_custom_call.1} parent=0 // loop_exit
    _

</llo_original>
